<compile_context>
chip_gen: v5e
topology: v5e:2x2
jax: 0.10.0
libtpu: 0.0.40
codegen_flags: <defaults>
</compile_context>

<pallas_src>
import functools

import jax
import jax.numpy as jnp
from jax.experimental import pallas as pl
from jax.experimental.pallas import tpu as pltpu


def _round_up(x, m):
    return (x + m - 1) // m * m


def gmf_kernel(user_ref, item_ref, w_ref, b_ref, out_ref):
    # Element-wise product on the VPU.
    prod = user_ref[...] * item_ref[...]                       # (tile_b, F)
    # logits[0, j] = sum_f w[0, f] * prod[j, f]  ->  (1, tile_b), lane-dense.
    logits = jax.lax.dot_general(
        w_ref[...], prod,
        dimension_numbers=(((1,), (1,)), ((), ())),
        preferred_element_type=jnp.float32,
    ) + b_ref[0, 0]
    # Exact sigmoid (EUP exp + divide).
    out_ref[...] = 1.0 / (1.0 + jnp.exp(-logits))


@functools.partial(jax.jit, static_argnames=("tile_b",))
def gmf_forward(user_idx, item_embedding, emb_table, fc_w, fc_b, *, tile_b=1024):
    B, F = item_embedding.shape

    # nn.Embedding lookup as a plain XLA gather -- no per-row DMAs in-kernel.
    user_emb = jnp.take(emb_table, user_idx.astype(jnp.int32), axis=0)   # (B, F)

    # Batch tile: multiple of 128 so the (1, tile_b) output row is lane-dense.
    tb = max(128, min(_round_up(tile_b, 128), _round_up(B, 128)))
    b_pad = _round_up(B, tb)
    # Give v7x's second TensorCore work when the batch is big enough.
    if b_pad // tb < 2 and B > 128:
        tb = max(128, _round_up(tb // 2, 128))
        b_pad = _round_up(B, tb)
    pad = b_pad - B

    user = jnp.pad(user_emb, ((0, pad), (0, 0)))       # padded rows are zeros
    item = jnp.pad(item_embedding, ((0, pad), (0, 0)))

    out = pl.pallas_call(
        gmf_kernel,
        out_shape=jax.ShapeDtypeStruct((1, b_pad), jnp.float32),
        grid=(b_pad // tb,),
        in_specs=[
            pl.BlockSpec((tb, F), lambda i: (i, 0)),            # user-emb tile
            pl.BlockSpec((tb, F), lambda i: (i, 0)),            # item-emb tile
            pl.BlockSpec((1, F), lambda i: (0, 0)),             # fc weight
            pl.BlockSpec(memory_space=pltpu.MemorySpace.SMEM),  # fc bias (scalar)
        ],
        out_specs=pl.BlockSpec((1, tb), lambda i: (0, i)),      # lane-dense row
        compiler_params=pltpu.CompilerParams(
            dimension_semantics=("parallel",),
        ),
    )(user, item, fc_w, fc_b)

    return out.reshape(-1)[:B]                                  # matches out.view(-1)


def init_params(key, user_num, factor_num):
    k1, k2, k3 = jax.random.split(key, 3)
    # nn.init.normal_(embedding.weight, std=0.01)
    emb_table = 0.01 * jax.random.normal(k1, (user_num, factor_num), jnp.float32)
    # nn.init.xavier_uniform_ on Linear(factor_num, 1).weight  (shape (1, F))
    bound_w = (6.0 / (factor_num + 1)) ** 0.5
    fc_w = jax.random.uniform(k2, (1, factor_num), jnp.float32, -bound_w, bound_w)
    # PyTorch Linear default bias init: U(-1/sqrt(fan_in), 1/sqrt(fan_in))
    bound_b = 1.0 / (factor_num ** 0.5)
    fc_b = jax.random.uniform(k3, (1, 1), jnp.float32, -bound_b, bound_b)
    return emb_table, fc_w, fc_b


if __name__ == "__main__":
    USER_NUM = 16
    FACTOR_NUM = 32
    BATCH = 8

    key = jax.random.PRNGKey(0)
    kp, ki, ke = jax.random.split(key, 3)

    emb_table, fc_w, fc_b = init_params(kp, USER_NUM, FACTOR_NUM)
    user_idx = jax.random.randint(ki, (BATCH,), 0, USER_NUM, jnp.int32)
    item_embedding = jax.random.normal(ke, (BATCH, FACTOR_NUM), jnp.float32)

    out = gmf_forward(user_idx, item_embedding, emb_table, fc_w, fc_b)
    out = jax.block_until_ready(out)

    # Pure-JAX reference check.
    u = emb_table[user_idx]
    ref = jax.nn.sigmoid(jnp.sum((u * item_embedding) * fc_w, axis=-1) + fc_b[0, 0])
    assert out.shape == (BATCH,)
    assert jnp.allclose(out, ref, atol=2e-3, rtol=2e-3), (out, ref)

    print("KERNEL_OK")
</pallas_src>

<mosaic_0001>
module attributes {stable_mosaic.version = 11 : i64} {
  func.func @gmf_kernel(%arg0: i32, %arg1: memref<128x32xf32, #tpu.memory_space<vmem>>, %arg2: memref<128x32xf32, #tpu.memory_space<vmem>>, %arg3: memref<1x32xf32, #tpu.memory_space<vmem>>, %arg4: memref<1x1xf32, #tpu.memory_space<smem>>, %arg5: memref<1x128xf32, #tpu.memory_space<vmem>>) attributes {dimension_semantics = [#tpu.dimension_semantics<parallel>], iteration_bounds = array<i64: 1>, scalar_prefetch = 0 : i64, scratch_operands = 0 : i64, tpu.core_type = #tpu.core_type<tc>, window_params = [{transform_indices = @transform_0, window_bounds = array<i64: 128, 32>}, {transform_indices = @transform_1, window_bounds = array<i64: 128, 32>}, {pipeline_mode = #tpu.pipeline_mode<synchronous>, transform_indices = @transform_2, window_bounds = array<i64: 1, 32>}, {transform_indices = @transform_3, window_bounds = array<i64: 1, 1>}, {transform_indices = @transform_4, window_bounds = array<i64: 1, 128>}]} {
    %c0 = arith.constant 0 : index
    %c0_0 = arith.constant 0 : index
    %0 = vector.load %arg1[%c0, %c0_0] : memref<128x32xf32, #tpu.memory_space<vmem>>, vector<128x32xf32>
    %c0_1 = arith.constant 0 : index
    %c0_2 = arith.constant 0 : index
    %1 = vector.load %arg2[%c0_1, %c0_2] : memref<128x32xf32, #tpu.memory_space<vmem>>, vector<128x32xf32>
    %2 = arith.mulf %0, %1 : vector<128x32xf32>
    %c0_3 = arith.constant 0 : index
    %c0_4 = arith.constant 0 : index
    %3 = vector.load %arg3[%c0_3, %c0_4] : memref<1x32xf32, #tpu.memory_space<vmem>>, vector<1x32xf32>
    %cst = arith.constant dense<0.000000e+00> : vector<1x128xf32>
    %4 = tpu.matmul %3, %2, %cst {dimension_numbers = #tpu.dot_dimension_numbers<[1], [1], [0], [0], [0, 0, 1, 0], [], []>} : vector<1x32xf32>, vector<128x32xf32>, vector<1x128xf32> -> vector<1x128xf32>
    %c0_5 = arith.constant 0 : index
    %c0_6 = arith.constant 0 : index
    %5 = memref.load %arg4[%c0_5, %c0_6] : memref<1x1xf32, #tpu.memory_space<smem>>
    %6 = vector.broadcast %5 : f32 to vector<1x128xf32>
    %7 = arith.addf %4, %6 : vector<1x128xf32>
    %cst_7 = arith.constant 0.000000e+00 : f32
    %8 = vector.broadcast %cst_7 : f32 to vector<1x128xf32>
    %9 = arith.subf %8, %7 : vector<1x128xf32>
    %10 = math.exp %9 : vector<1x128xf32>
    %cst_8 = arith.constant 1.000000e+00 : f32
    %11 = vector.broadcast %cst_8 : f32 to vector<1x128xf32>
    %12 = arith.addf %11, %10 : vector<1x128xf32>
    %cst_9 = arith.constant 1.000000e+00 : f32
    %13 = vector.broadcast %cst_9 : f32 to vector<1x128xf32>
    %14 = arith.divf %13, %12 : vector<1x128xf32>
    %c0_10 = arith.constant 0 : index
    %c0_11 = arith.constant 0 : index
    %15 = vector.load %arg5[%c0_10, %c0_11] : memref<1x128xf32, #tpu.memory_space<vmem>>, vector<1x128xf32>
    tpu.vector_store %arg5[%c0_10, %c0_11], %14 {strides = array<i32>} : memref<1x128xf32, #tpu.memory_space<vmem>>, vector<1x128xf32>,
    return
  }
  func.func @transform_0(%arg0: i32) -> (i32, i32) {
    %c0_i32 = arith.constant 0 : i32
    %c0_i32_0 = arith.constant 0 : i32
    return %arg0, %c0_i32 : i32, i32
  }
  func.func @transform_1(%arg0: i32) -> (i32, i32) {
    %c0_i32 = arith.constant 0 : i32
    %c0_i32_0 = arith.constant 0 : i32
    return %arg0, %c0_i32 : i32, i32
  }
  func.func @transform_2(%arg0: i32) -> (i32, i32) {
    %c0_i32 = arith.constant 0 : i32
    %c0_i32_0 = arith.constant 0 : i32
    %c0_i32_1 = arith.constant 0 : i32
    return %c0_i32, %c0_i32_0 : i32, i32
  }
  func.func @transform_3(%arg0: i32) -> (i32, i32) {
    %c0_i32 = arith.constant 0 : i32
    %c0_i32_0 = arith.constant 0 : i32
    %c0_i32_1 = arith.constant 0 : i32
    return %c0_i32, %c0_i32_0 : i32, i32
  }
  func.func @transform_4(%arg0: i32) -> (i32, i32) {
    %c0_i32 = arith.constant 0 : i32
    %c0_i32_0 = arith.constant 0 : i32
    return %c0_i32, %arg0 : i32, i32
  }
}

</mosaic_0001>

<llo_original>
// kernel: gmf_forward.1
$region0: #{gmf_forward.1}
  #allocation0 [shape = 'u32[]', space=smem, size = 0x4, offset = 0x4, fixed_abs, tag = 'smem constant byte address 0x4 - core index']
  #allocation1 [shape = 'u32[72,128]{1,0:T(1,128)}', space=vmem, size = 0x9000, scoped, tag = 'internal scratch']
  #allocation2 [shape = 'f32[1,1]{1,0:T(1,128)S(6)}', space=smem, size = 0x200, scoped, tag = 'scoped memory for gmf_forward.1']
  %s0 = inlined_call_operand.vmem [shape: f32[128,32], index: 0, kind: input, shape index: {}]
  %s1 = inlined_call_operand.vmem [shape: f32[128,32], index: 1, kind: input, shape index: {}]
  %s2 = inlined_call_operand.vmem [shape: f32[1,32], index: 2, kind: input, shape index: {}]
  %s3 = inlined_call_operand.<no memory space> [shape: f32[1,1], index: 3, kind: input, shape index: {}]
  %s4 = inlined_call_operand.vmem [shape: f32[1,128], index: 4, kind: output, shape index: {}]
  %s5 = sld [smem:[#allocation0]]
  $region26: #{gmf_forward.1} parent=0
    _
  %s7 = ssub.s32 1, %s5
  %s8 = scalar_select 0, %s7, %s5
  %9 = sst [smem:[#allocation2]] %s3
  // Predicated region
  $region2: #{gmf_forward.1} parent=0 // pred_check
    _
  $region3: #{gmf_forward.1} parent=0 // pred_check_branch
    %11 = sbr.rel (0) target = $region5
  $region4: #{gmf_forward.1} parent=0 // pred_region
    _
  $region5: #{gmf_forward.1} parent=0 // pred_fallthru
    _
  // Predicated region
  $region6: #{gmf_forward.1} parent=0 // pred_check
    _
  $region7: #{gmf_forward.1} parent=0 // pred_check_branch
    %13 = sbr.rel (0) target = $region9
  $region8: #{gmf_forward.1} parent=0 // pred_region
    _
  $region9: #{gmf_forward.1} parent=0 // pred_fallthru
    _
  // Predicated region
  $region10: #{gmf_forward.1} parent=0 // pred_check
    _
  $region11: #{gmf_forward.1} parent=0 // pred_check_branch
    %15 = sbr.rel (0) target = $region13
  $region12: #{gmf_forward.1} parent=0 // pred_region
    _
  $region13: #{gmf_forward.1} parent=0 // pred_fallthru
    _
  // Predicated region
  $region14: #{gmf_forward.1} parent=0 // pred_check
    _
  $region15: #{gmf_forward.1} parent=0 // pred_check_branch
    %17 = sbr.rel (0) target = $region17
  $region16: #{gmf_forward.1} parent=0 // pred_region
    _
  $region17: #{gmf_forward.1} parent=0 // pred_fallthru
    _
  %v18 = vld [vmem:[%s0] sm:$0xff]
  %v19 = vld [vmem:[%s0 + $0x8] sm:$0xff]
  %v20 = vld [vmem:[%s0 + $0x10] sm:$0xff]
  %v21 = vld [vmem:[%s0 + $0x18] sm:$0xff]
  %v22 = vld [vmem:[%s0 + $0x20] sm:$0xff]
  %v23 = vld [vmem:[%s0 + $0x28] sm:$0xff]
  %v24 = vld [vmem:[%s0 + $0x30] sm:$0xff]
  %v25 = vld [vmem:[%s0 + $0x38] sm:$0xff]
  %v26 = vld [vmem:[%s0 + $0x40] sm:$0xff]
  %v27 = vld [vmem:[%s0 + $0x48] sm:$0xff]
  %v28 = vld [vmem:[%s0 + $0x50] sm:$0xff]
  %v29 = vld [vmem:[%s0 + $0x58] sm:$0xff]
  %v30 = vld [vmem:[%s0 + $0x60] sm:$0xff]
  %v31 = vld [vmem:[%s0 + $0x68] sm:$0xff]
  %v32 = vld [vmem:[%s0 + $0x70] sm:$0xff]
  %v33 = vld [vmem:[%s0 + $0x78] sm:$0xff]
  %v34 = vld [vmem:[%s1] sm:$0xff]
  %v35 = vld [vmem:[%s1 + $0x8] sm:$0xff]
  %v36 = vld [vmem:[%s1 + $0x10] sm:$0xff]
  %v37 = vld [vmem:[%s1 + $0x18] sm:$0xff]
  %v38 = vld [vmem:[%s1 + $0x20] sm:$0xff]
  %v39 = vld [vmem:[%s1 + $0x28] sm:$0xff]
  %v40 = vld [vmem:[%s1 + $0x30] sm:$0xff]
  %v41 = vld [vmem:[%s1 + $0x38] sm:$0xff]
  %v42 = vld [vmem:[%s1 + $0x40] sm:$0xff]
  %v43 = vld [vmem:[%s1 + $0x48] sm:$0xff]
  %v44 = vld [vmem:[%s1 + $0x50] sm:$0xff]
  %v45 = vld [vmem:[%s1 + $0x58] sm:$0xff]
  %v46 = vld [vmem:[%s1 + $0x60] sm:$0xff]
  %v47 = vld [vmem:[%s1 + $0x68] sm:$0xff]
  %v48 = vld [vmem:[%s1 + $0x70] sm:$0xff]
  %v49 = vld [vmem:[%s1 + $0x78] sm:$0xff]
  %v50 = vmul.f32 %v18, %v34
  %v51 = vmul.f32 %v19, %v35
  %v52 = vmul.f32 %v20, %v36
  %v53 = vmul.f32 %v21, %v37
  %v54 = vmul.f32 %v22, %v38
  %v55 = vmul.f32 %v23, %v39
  %v56 = vmul.f32 %v24, %v40
  %v57 = vmul.f32 %v25, %v41
  %v58 = vmul.f32 %v26, %v42
  %v59 = vmul.f32 %v27, %v43
  %v60 = vmul.f32 %v28, %v44
  %v61 = vmul.f32 %v29, %v45
  %v62 = vmul.f32 %v30, %v46
  %v63 = vmul.f32 %v31, %v47
  %v64 = vmul.f32 %v32, %v48
  %v65 = vmul.f32 %v33, %v49
  %v66 = vld [vmem:[%s2] sm:$0x1]
  %s67 = sld [smem:[#allocation2]]
  %v68 = vstv %s67
  %vm69 = vcmask 261120
  %v71 = vsel %vm69, %v66, 0
  %v74 = vsel %vm69, %v50, 0
  %v77 = vsel %vm69, %v51, 0
  %v80 = vsel %vm69, %v52, 0
  %v83 = vsel %vm69, %v53, 0
  %v86 = vsel %vm69, %v54, 0
  %v89 = vsel %vm69, %v55, 0
  %v92 = vsel %vm69, %v56, 0
  %v95 = vsel %vm69, %v57, 0
  %v98 = vsel %vm69, %v58, 0
  %v101 = vsel %vm69, %v59, 0
  %v104 = vsel %vm69, %v60, 0
  %v107 = vsel %vm69, %v61, 0
  %v110 = vsel %vm69, %v62, 0
  %v113 = vsel %vm69, %v63, 0
  %v116 = vsel %vm69, %v64, 0
  %v119 = vsel %vm69, %v65, 0
  %121 = vmatpush.xpose.msra.mxu0 %v119
  %122 = vmatpush.xpose.msra.mxu0 %v116
  %123 = vmatpush.xpose.msra.mxu0 %v113
  %124 = vmatpush.xpose.msra.mxu0 %v110
  %125 = vmatpush.xpose.msra.mxu0 %v107
  %126 = vmatpush.xpose.msra.mxu0 %v104
  %127 = vmatpush.xpose.msra.mxu0 %v101
  %128 = vmatpush.xpose.msra.mxu0 %v98
  %129 = vmatpush.xpose.msra.mxu0 %v95
  %130 = vmatpush.xpose.msra.mxu0 %v92
  %131 = vmatpush.xpose.msra.mxu0 %v89
  %132 = vmatpush.xpose.msra.mxu0 %v86
  %133 = vmatpush.xpose.msra.mxu0 %v83
  %134 = vmatpush.xpose.msra.mxu0 %v80
  %135 = vmatpush.xpose.msra.mxu0 %v77
  %136 = vmatpush.xpose.msra.mxu0 %v74
  %137 = vmatmul.f32.gmra.mxu0 %v71
  %v138 = vpop.f32.mrf.mxu0
  %v139 = vadd.f32 %v68, %v138
  %140 = vdwg.mxu0
  %v141 = vsub.f32 0.0, %v139
  %v142 = vmul.f32 %v141, 1.442695
  %v143 = vpow.pop %v142
  %v144 = vadd.f32 %v143, 1.0
  %v145 = vrcp.pop %v144
  %v146 = vmul.f32 %v144, %v145
  %v147 = vsub.f32 1.0, %v146
  %v148 = vmul.f32 %v145, %v147
  %v149 = vadd.f32 %v145, %v148
  %vm150 = vweird.f32 %v144
  %vm151 = vweird.f32 %v145
  %vm152 = vmor %vm150, %vm151
  %v153 = vsel %vm152, %v145, %v149
  %v154 = vand.u32 2147483647, %v144
  %vm155 = vcmp.eq.f32.partialorder %v154, 8.507059e+37
  %v156 = vand.u32 %v144, 2147483648
  %v157 = vor.u32 1.1754944e-38, %v156
  %v158 = vsel %vm155, %v157, %v153
  %v159 = vmul.f32 1.0, %v158
  %160 = vst [vmem:[%s4] sm:$0x1] %v159
  // Predicated region
  $region18: #{gmf_forward.1} parent=0 // pred_check
    _
  $region19: #{gmf_forward.1} parent=0 // pred_check_branch
    %162 = sbr.rel (0) target = $region21
  $region20: #{gmf_forward.1} parent=0 // pred_region
    _
  $region21: #{gmf_forward.1} parent=0 // pred_fallthru
    _
  // Predicated region
  $region22: #{gmf_forward.1} parent=0 // pred_check
    _
  $region23: #{gmf_forward.1} parent=0 // pred_check_branch
    %164 = sbr.rel (0) target = $region25
  $region24: #{gmf_forward.1} parent=0 // pred_region
    _
  $region25: #{gmf_forward.1} parent=0 // pred_fallthru
    _

</llo_original>
